<compile_context>
chip_gen: v7x
topology: tpu7x:2x2x1
jax: 0.10.0
libtpu: 0.0.40
codegen_flags: <defaults>
</compile_context>

<pallas_src>
import jax
import jax.numpy as jnp
from jax.experimental import pallas as pl
from jax.experimental.pallas import tpu as pltpu

_LANE = 128     # vreg lane width
_SUBLANE = 8    # vreg sublane count

_HIDDEN = (128, 64, 32, 64, 128)   # encoder/decoder hidden widths (original module)


def _round_up(x, m):
    return ((x + m - 1) // m) * m


def _cdiv(a, b):
    return (a + b - 1) // b


# ----------------------------------------------------------------------------- kernel
def _ae_kernel(x_ref,
               w1_ref, b1_ref, w2_ref, b2_ref, w3_ref, b3_ref,
               w4_ref, b4_ref, w5_ref, b5_ref, w6_ref, b6_ref,
               o_ref):
    """One batch tile through all 6 fused Linear(+ReLU) layers.

    Weights/biases are VMEM-resident across the whole grid; activations live
    only in vregs/VMEM (never round-trip to HBM between layers).
    """
    layers = (
        (w1_ref, b1_ref, True),
        (w2_ref, b2_ref, True),
        (w3_ref, b3_ref, True),
        (w4_ref, b4_ref, True),
        (w5_ref, b5_ref, True),
        (w6_ref, b6_ref, False),   # final decoder layer: no ReLU
    )
    h = x_ref[...]
    for w_ref, b_ref, relu in layers:
        # MXU matmul in the weights' dtype (bf16 production / f32 debug),
        # always with f32 accumulation.
        y = jnp.dot(h.astype(w_ref.dtype), w_ref[...],
                    preferred_element_type=jnp.float32)
        # Bias-add / ReLU in the bias dtype: bf16 on v6e/v7x (bf16 VPU),
        # f32 on v5e and older (no bf16 elementwise path there).
        y = y.astype(b_ref.dtype) + b_ref[...]
        h = jnp.maximum(y, 0.0) if relu else y
    o_ref[...] = h.astype(o_ref.dtype)


# ----------------------------------------------------------------------------- params
def _default_act_dtype(compute_dtype):
    """bf16 elementwise only on chips that have a bf16 VPU (v6e / v7x)."""
    if jnp.dtype(compute_dtype) == jnp.dtype(jnp.float32):
        return jnp.float32
    try:
        kind = jax.devices()[0].device_kind.lower()
    except Exception:  # pragma: no cover - defensive
        kind = ""
    return jnp.bfloat16 if ("v6" in kind or "v7" in kind) else jnp.float32


def prepare_params(params, *, compute_dtype=jnp.bfloat16, act_dtype=None):
    """One-time weight/bias cast, hoisted out of the per-call hot path.

    compute_dtype: MXU input dtype for the weights (bf16 in production;
                   f32 is a debug-only near-exact path).
    act_dtype:     dtype for bias-add / ReLU intermediates; defaults to bf16
                   on v6e/v7x and f32 otherwise.
    """
    if act_dtype is None:
        act_dtype = _default_act_dtype(compute_dtype)
    prepared = {}
    for i in range(1, 7):
        prepared[f"w{i}"] = jnp.asarray(params[f"w{i}"], compute_dtype)
        prepared[f"b{i}"] = jnp.asarray(params[f"b{i}"], act_dtype).reshape(1, -1)
    return prepared


# ----------------------------------------------------------------------------- forward
def anomaly_forward(x, prepared, *, block_b=1024):
    """x: (B, input_dim) f32. prepared: output of prepare_params()."""
    B, d_in = x.shape
    assert prepared["w1"].shape[0] == d_in and prepared["w6"].shape[1] == d_in

    # ---- batch tiling -------------------------------------------------------
    # Pad the batch only up to a sublane multiple (<= 7 extra rows). No lane
    # padding of x/out in HBM: the feature dim d_in equals the full array dim,
    # which is a legal block shape even when d_in % 128 != 0.
    b_pad = _round_up(B, _SUBLANE)
    if b_pad != B:
        x = jnp.zeros((b_pad, d_in), x.dtype).at[:B].set(x)

    tb = min(_round_up(block_b, _SUBLANE), b_pad)
    # Keep >= 2 grid steps whenever the batch allows it so both TensorCores
    # get work on v7x ("parallel" batch axis); on 1-TC chips the extra grid
    # step costs ~0.35 us, i.e. nothing.
    if b_pad >= 2 * _SUBLANE:
        tb = min(tb, _round_up(_cdiv(b_pad, 2), _SUBLANE))
    grid = (_cdiv(b_pad, tb),)
    # If tb does not divide b_pad, Pallas masks the last block's out-of-bounds
    # rows (undefined on input, discarded on output) -> no tb-sized HBM pad.

    # ---- BlockSpecs: x/out tiled over batch, weights/biases VMEM-resident ---
    x_spec = pl.BlockSpec((tb, d_in), lambda i: (i, 0))
    out_spec = pl.BlockSpec((tb, d_in), lambda i: (i, 0))

    def resident(arr):
        # Constant block index -> DMA'd once, stays resident while x/out
        # tiles stream through the pipeline.
        return pl.BlockSpec(arr.shape, lambda i: (0, 0))

    in_specs = [x_spec]
    operands = [x]
    for i in range(1, 7):
        w, b = prepared[f"w{i}"], prepared[f"b{i}"]
        in_specs += [resident(w), resident(b)]
        operands += [w, b]

    # ---- advisory cost estimate for XLA scheduling --------------------------
    dims = (d_in,) + _HIDDEN + (d_in,)
    flops = 2 * b_pad * sum(dims[i] * dims[i + 1] for i in range(6))
    bytes_accessed = (
        b_pad * d_in * x.dtype.itemsize
        + sum(int(prepared[f"w{i}"].size) * prepared[f"w{i}"].dtype.itemsize
              for i in range(1, 7))
        + sum(int(prepared[f"b{i}"].size) * prepared[f"b{i}"].dtype.itemsize
              for i in range(1, 7))
        + b_pad * d_in * 4
    )
    cost = pl.CostEstimate(flops=flops, transcendentals=0,
                           bytes_accessed=bytes_accessed)

    out = pl.pallas_call(
        _ae_kernel,
        out_shape=jax.ShapeDtypeStruct((b_pad, d_in), jnp.float32),
        grid=grid,
        in_specs=in_specs,
        out_specs=out_spec,
        compiler_params=pltpu.CompilerParams(
            dimension_semantics=("parallel",),       # megacore split on v7x
            vmem_limit_bytes=32 * 1024 * 1024,
        ),
        cost_estimate=cost,
    )(*operands)

    # strip the (at most 7-row) sublane batch pad
    return out if b_pad == B else out[:B]


# ----------------------------------------------------------------------------- reference / init
def init_params(key, input_dim):
    """PyTorch-style nn.Linear init: U(-1/sqrt(fan_in), 1/sqrt(fan_in))."""
    def linear_init(k, fan_in, fan_out):
        kw, kb = jax.random.split(k)
        bound = 1.0 / jnp.sqrt(jnp.float32(fan_in))
        w = jax.random.uniform(kw, (fan_in, fan_out), jnp.float32, -bound, bound)
        b = jax.random.uniform(kb, (1, fan_out), jnp.float32, -bound, bound)
        return w, b

    dims = (input_dim,) + _HIDDEN + (input_dim,)
    keys = jax.random.split(key, 6)
    params = {}
    for i in range(6):
        w, b = linear_init(keys[i], dims[i], dims[i + 1])
        params[f"w{i + 1}"] = w
        params[f"b{i + 1}"] = b
    return params


def anomaly_reference(x, params):
    """Pure-JAX reference matching the PyTorch forward."""
    h = x
    for i in range(1, 6):
        h = jnp.maximum(h @ params[f"w{i}"] + params[f"b{i}"], 0.0)
    return h @ params["w6"] + params["b6"]


# ----------------------------------------------------------------------------- demo
if __name__ == "__main__":
    key = jax.random.PRNGKey(0)
    k_params, k_x1, k_x2 = jax.random.split(key, 3)

    input_dim = 32
    params = init_params(k_params, input_dim)

    # --- tiny batch (2, 32) ---------------------------------------------------
    x_small = jax.random.normal(k_x1, (2, input_dim), jnp.float32)
    ref_small = anomaly_reference(x_small, params)

    # f32 debug path: near-exact vs reference.
    prep_f32 = prepare_params(params, compute_dtype=jnp.float32)
    out_f32 = jax.block_until_ready(anomaly_forward(x_small, prep_f32))
    assert out_f32.shape == x_small.shape
    assert jnp.allclose(out_f32, ref_small, atol=1e-5, rtol=1e-5)

    # Production path: bf16 weights, bf16 intermediates on v6e/v7x (f32 on v5e).
    prep_prod = prepare_params(params)
    fwd = jax.jit(anomaly_forward)
    out_small = jax.block_until_ready(fwd(x_small, prep_prod))
    assert out_small.shape == x_small.shape
    assert jnp.allclose(out_small, ref_small, atol=2e-1, rtol=2e-1)

    # --- multi-tile batch: exercises the pipelined / megacore grid path --------
    x_big = jax.random.normal(k_x2, (1024, input_dim), jnp.float32)
    ref_big = anomaly_reference(x_big, params)
    out_big = jax.block_until_ready(fwd(x_big, prep_prod))
    assert out_big.shape == x_big.shape
    assert jnp.allclose(out_big, ref_big, atol=2e-1, rtol=2e-1)

    print("KERNEL_OK")
</pallas_src>

<mosaic_0001>
module attributes {stable_mosaic.version = 11 : i64} {
  func.func @_ae_kernel(%arg0: i32, %arg1: memref<8x32xf32, #tpu.memory_space<vmem>>, %arg2: memref<32x128xf32, #tpu.memory_space<vmem>>, %arg3: memref<1x128xf32, #tpu.memory_space<vmem>>, %arg4: memref<128x64xf32, #tpu.memory_space<vmem>>, %arg5: memref<1x64xf32, #tpu.memory_space<vmem>>, %arg6: memref<64x32xf32, #tpu.memory_space<vmem>>, %arg7: memref<1x32xf32, #tpu.memory_space<vmem>>, %arg8: memref<32x64xf32, #tpu.memory_space<vmem>>, %arg9: memref<1x64xf32, #tpu.memory_space<vmem>>, %arg10: memref<64x128xf32, #tpu.memory_space<vmem>>, %arg11: memref<1x128xf32, #tpu.memory_space<vmem>>, %arg12: memref<128x32xf32, #tpu.memory_space<vmem>>, %arg13: memref<1x32xf32, #tpu.memory_space<vmem>>, %arg14: memref<8x32xf32, #tpu.memory_space<vmem>>) attributes {dimension_semantics = [#tpu.dimension_semantics<parallel>], iteration_bounds = array<i64: 1>, scalar_prefetch = 0 : i64, scratch_operands = 0 : i64, tpu.core_type = #tpu.core_type<tc>, window_params = [{transform_indices = @transform_0, window_bounds = array<i64: 8, 32>}, {pipeline_mode = #tpu.pipeline_mode<synchronous>, transform_indices = @transform_1, window_bounds = array<i64: 32, 128>}, {pipeline_mode = #tpu.pipeline_mode<synchronous>, transform_indices = @transform_2, window_bounds = array<i64: 1, 128>}, {pipeline_mode = #tpu.pipeline_mode<synchronous>, transform_indices = @transform_3, window_bounds = array<i64: 128, 64>}, {pipeline_mode = #tpu.pipeline_mode<synchronous>, transform_indices = @transform_4, window_bounds = array<i64: 1, 64>}, {pipeline_mode = #tpu.pipeline_mode<synchronous>, transform_indices = @transform_5, window_bounds = array<i64: 64, 32>}, {pipeline_mode = #tpu.pipeline_mode<synchronous>, transform_indices = @transform_6, window_bounds = array<i64: 1, 32>}, {pipeline_mode = #tpu.pipeline_mode<synchronous>, transform_indices = @transform_7, window_bounds = array<i64: 32, 64>}, {pipeline_mode = #tpu.pipeline_mode<synchronous>, transform_indices = @transform_8, window_bounds = array<i64: 1, 64>}, {pipeline_mode = #tpu.pipeline_mode<synchronous>, transform_indices = @transform_9, window_bounds = array<i64: 64, 128>}, {pipeline_mode = #tpu.pipeline_mode<synchronous>, transform_indices = @transform_10, window_bounds = array<i64: 1, 128>}, {pipeline_mode = #tpu.pipeline_mode<synchronous>, transform_indices = @transform_11, window_bounds = array<i64: 128, 32>}, {pipeline_mode = #tpu.pipeline_mode<synchronous>, transform_indices = @transform_12, window_bounds = array<i64: 1, 32>}, {transform_indices = @transform_13, window_bounds = array<i64: 8, 32>}]} {
    %c0 = arith.constant 0 : index
    %c0_0 = arith.constant 0 : index
    %0 = vector.load %arg1[%c0, %c0_0] : memref<8x32xf32, #tpu.memory_space<vmem>>, vector<8x32xf32>
    %c0_1 = arith.constant 0 : index
    %c0_2 = arith.constant 0 : index
    %1 = vector.load %arg2[%c0_1, %c0_2] : memref<32x128xf32, #tpu.memory_space<vmem>>, vector<32x128xf32>
    %cst = arith.constant dense<0.000000e+00> : vector<8x128xf32>
    %2 = tpu.matmul %0, %1, %cst {dimension_numbers = #tpu.dot_dimension_numbers<[1], [0], [0], [1], [0, 0, 1, 1], [], []>} : vector<8x32xf32>, vector<32x128xf32>, vector<8x128xf32> -> vector<8x128xf32>
    %c0_3 = arith.constant 0 : index
    %c0_4 = arith.constant 0 : index
    %3 = vector.load %arg3[%c0_3, %c0_4] : memref<1x128xf32, #tpu.memory_space<vmem>>, vector<1x128xf32>
    %4 = vector.broadcast %3 : vector<1x128xf32> to vector<8x128xf32>
    %5 = arith.addf %2, %4 : vector<8x128xf32>
    %cst_5 = arith.constant 0.000000e+00 : f32
    %6 = vector.broadcast %cst_5 : f32 to vector<8x128xf32>
    %7 = arith.maximumf %5, %6 : vector<8x128xf32>
    %c0_6 = arith.constant 0 : index
    %c0_7 = arith.constant 0 : index
    %8 = vector.load %arg4[%c0_6, %c0_7] : memref<128x64xf32, #tpu.memory_space<vmem>>, vector<128x64xf32>
    %cst_8 = arith.constant dense<0.000000e+00> : vector<8x64xf32>
    %9 = tpu.matmul %7, %8, %cst_8 {dimension_numbers = #tpu.dot_dimension_numbers<[1], [0], [0], [1], [0, 0, 1, 1], [], []>} : vector<8x128xf32>, vector<128x64xf32>, vector<8x64xf32> -> vector<8x64xf32>
    %c0_9 = arith.constant 0 : index
    %c0_10 = arith.constant 0 : index
    %10 = vector.load %arg5[%c0_9, %c0_10] : memref<1x64xf32, #tpu.memory_space<vmem>>, vector<1x64xf32>
    %11 = vector.broadcast %10 : vector<1x64xf32> to vector<8x64xf32>
    %12 = arith.addf %9, %11 : vector<8x64xf32>
    %cst_11 = arith.constant 0.000000e+00 : f32
    %13 = vector.broadcast %cst_11 : f32 to vector<8x64xf32>
    %14 = arith.maximumf %12, %13 : vector<8x64xf32>
    %c0_12 = arith.constant 0 : index
    %c0_13 = arith.constant 0 : index
    %15 = vector.load %arg6[%c0_12, %c0_13] : memref<64x32xf32, #tpu.memory_space<vmem>>, vector<64x32xf32>
    %cst_14 = arith.constant dense<0.000000e+00> : vector<8x32xf32>
    %16 = tpu.matmul %14, %15, %cst_14 {dimension_numbers = #tpu.dot_dimension_numbers<[1], [0], [0], [1], [0, 0, 1, 1], [], []>} : vector<8x64xf32>, vector<64x32xf32>, vector<8x32xf32> -> vector<8x32xf32>
    %c0_15 = arith.constant 0 : index
    %c0_16 = arith.constant 0 : index
    %17 = vector.load %arg7[%c0_15, %c0_16] : memref<1x32xf32, #tpu.memory_space<vmem>>, vector<1x32xf32>
    %18 = vector.broadcast %17 : vector<1x32xf32> to vector<8x32xf32>
    %19 = arith.addf %16, %18 : vector<8x32xf32>
    %cst_17 = arith.constant 0.000000e+00 : f32
    %20 = vector.broadcast %cst_17 : f32 to vector<8x32xf32>
    %21 = arith.maximumf %19, %20 : vector<8x32xf32>
    %c0_18 = arith.constant 0 : index
    %c0_19 = arith.constant 0 : index
    %22 = vector.load %arg8[%c0_18, %c0_19] : memref<32x64xf32, #tpu.memory_space<vmem>>, vector<32x64xf32>
    %cst_20 = arith.constant dense<0.000000e+00> : vector<8x64xf32>
    %23 = tpu.matmul %21, %22, %cst_20 {dimension_numbers = #tpu.dot_dimension_numbers<[1], [0], [0], [1], [0, 0, 1, 1], [], []>} : vector<8x32xf32>, vector<32x64xf32>, vector<8x64xf32> -> vector<8x64xf32>
    %c0_21 = arith.constant 0 : index
    %c0_22 = arith.constant 0 : index
    %24 = vector.load %arg9[%c0_21, %c0_22] : memref<1x64xf32, #tpu.memory_space<vmem>>, vector<1x64xf32>
    %25 = vector.broadcast %24 : vector<1x64xf32> to vector<8x64xf32>
    %26 = arith.addf %23, %25 : vector<8x64xf32>
    %cst_23 = arith.constant 0.000000e+00 : f32
    %27 = vector.broadcast %cst_23 : f32 to vector<8x64xf32>
    %28 = arith.maximumf %26, %27 : vector<8x64xf32>
    %c0_24 = arith.constant 0 : index
    %c0_25 = arith.constant 0 : index
    %29 = vector.load %arg10[%c0_24, %c0_25] : memref<64x128xf32, #tpu.memory_space<vmem>>, vector<64x128xf32>
    %cst_26 = arith.constant dense<0.000000e+00> : vector<8x128xf32>
    %30 = tpu.matmul %28, %29, %cst_26 {dimension_numbers = #tpu.dot_dimension_numbers<[1], [0], [0], [1], [0, 0, 1, 1], [], []>} : vector<8x64xf32>, vector<64x128xf32>, vector<8x128xf32> -> vector<8x128xf32>
    %c0_27 = arith.constant 0 : index
    %c0_28 = arith.constant 0 : index
    %31 = vector.load %arg11[%c0_27, %c0_28] : memref<1x128xf32, #tpu.memory_space<vmem>>, vector<1x128xf32>
    %32 = vector.broadcast %31 : vector<1x128xf32> to vector<8x128xf32>
    %33 = arith.addf %30, %32 : vector<8x128xf32>
    %cst_29 = arith.constant 0.000000e+00 : f32
    %34 = vector.broadcast %cst_29 : f32 to vector<8x128xf32>
    %35 = arith.maximumf %33, %34 : vector<8x128xf32>
    %c0_30 = arith.constant 0 : index
    %c0_31 = arith.constant 0 : index
    %36 = vector.load %arg12[%c0_30, %c0_31] : memref<128x32xf32, #tpu.memory_space<vmem>>, vector<128x32xf32>
    %cst_32 = arith.constant dense<0.000000e+00> : vector<8x32xf32>
    %37 = tpu.matmul %35, %36, %cst_32 {dimension_numbers = #tpu.dot_dimension_numbers<[1], [0], [0], [1], [0, 0, 1, 1], [], []>} : vector<8x128xf32>, vector<128x32xf32>, vector<8x32xf32> -> vector<8x32xf32>
    %c0_33 = arith.constant 0 : index
    %c0_34 = arith.constant 0 : index
    %38 = vector.load %arg13[%c0_33, %c0_34] : memref<1x32xf32, #tpu.memory_space<vmem>>, vector<1x32xf32>
    %39 = vector.broadcast %38 : vector<1x32xf32> to vector<8x32xf32>
    %40 = arith.addf %37, %39 : vector<8x32xf32>
    %c0_35 = arith.constant 0 : index
    %c0_36 = arith.constant 0 : index
    %41 = vector.load %arg14[%c0_35, %c0_36] : memref<8x32xf32, #tpu.memory_space<vmem>>, vector<8x32xf32>
    tpu.vector_store %arg14[%c0_35, %c0_36], %40 {strides = array<i32>} : memref<8x32xf32, #tpu.memory_space<vmem>>, vector<8x32xf32>,
    return
  }
  func.func @transform_0(%arg0: i32) -> (i32, i32) {
    %c0_i32 = arith.constant 0 : i32
    %c0_i32_0 = arith.constant 0 : i32
    return %arg0, %c0_i32 : i32, i32
  }
  func.func @transform_1(%arg0: i32) -> (i32, i32) {
    %c0_i32 = arith.constant 0 : i32
    %c0_i32_0 = arith.constant 0 : i32
    %c0_i32_1 = arith.constant 0 : i32
    return %c0_i32, %c0_i32_0 : i32, i32
  }
  func.func @transform_2(%arg0: i32) -> (i32, i32) {
    %c0_i32 = arith.constant 0 : i32
    %c0_i32_0 = arith.constant 0 : i32
    %c0_i32_1 = arith.constant 0 : i32
    return %c0_i32, %c0_i32_0 : i32, i32
  }
  func.func @transform_3(%arg0: i32) -> (i32, i32) {
    %c0_i32 = arith.constant 0 : i32
    %c0_i32_0 = arith.constant 0 : i32
    %c0_i32_1 = arith.constant 0 : i32
    return %c0_i32, %c0_i32_0 : i32, i32
  }
  func.func @transform_4(%arg0: i32) -> (i32, i32) {
    %c0_i32 = arith.constant 0 : i32
    %c0_i32_0 = arith.constant 0 : i32
    %c0_i32_1 = arith.constant 0 : i32
    return %c0_i32, %c0_i32_0 : i32, i32
  }
  func.func @transform_5(%arg0: i32) -> (i32, i32) {
    %c0_i32 = arith.constant 0 : i32
    %c0_i32_0 = arith.constant 0 : i32
    %c0_i32_1 = arith.constant 0 : i32
    return %c0_i32, %c0_i32_0 : i32, i32
  }
  func.func @transform_6(%arg0: i32) -> (i32, i32) {
    %c0_i32 = arith.constant 0 : i32
    %c0_i32_0 = arith.constant 0 : i32
    %c0_i32_1 = arith.constant 0 : i32
    return %c0_i32, %c0_i32_0 : i32, i32
  }
  func.func @transform_7(%arg0: i32) -> (i32, i32) {
    %c0_i32 = arith.constant 0 : i32
    %c0_i32_0 = arith.constant 0 : i32
    %c0_i32_1 = arith.constant 0 : i32
    return %c0_i32, %c0_i32_0 : i32, i32
  }
  func.func @transform_8(%arg0: i32) -> (i32, i32) {
    %c0_i32 = arith.constant 0 : i32
    %c0_i32_0 = arith.constant 0 : i32
    %c0_i32_1 = arith.constant 0 : i32
    return %c0_i32, %c0_i32_0 : i32, i32
  }
  func.func @transform_9(%arg0: i32) -> (i32, i32) {
    %c0_i32 = arith.constant 0 : i32
    %c0_i32_0 = arith.constant 0 : i32
    %c0_i32_1 = arith.constant 0 : i32
    return %c0_i32, %c0_i32_0 : i32, i32
  }
  func.func @transform_10(%arg0: i32) -> (i32, i32) {
    %c0_i32 = arith.constant 0 : i32
    %c0_i32_0 = arith.constant 0 : i32
    %c0_i32_1 = arith.constant 0 : i32
    return %c0_i32, %c0_i32_0 : i32, i32
  }
  func.func @transform_11(%arg0: i32) -> (i32, i32) {
    %c0_i32 = arith.constant 0 : i32
    %c0_i32_0 = arith.constant 0 : i32
    %c0_i32_1 = arith.constant 0 : i32
    return %c0_i32, %c0_i32_0 : i32, i32
  }
  func.func @transform_12(%arg0: i32) -> (i32, i32) {
    %c0_i32 = arith.constant 0 : i32
    %c0_i32_0 = arith.constant 0 : i32
    %c0_i32_1 = arith.constant 0 : i32
    return %c0_i32, %c0_i32_0 : i32, i32
  }
  func.func @transform_13(%arg0: i32) -> (i32, i32) {
    %c0_i32 = arith.constant 0 : i32
    %c0_i32_0 = arith.constant 0 : i32
    return %arg0, %c0_i32 : i32, i32
  }
}

</mosaic_0001>

<llo_original>
// kernel: tpu_custom_call.1
$region0: #{tpu_custom_call.1}
  #allocation0 [shape = 'u32[]', space=smem, size = 0x4, offset = 0x4, fixed_abs, tag = 'smem constant byte address 0x4 - core index']
  #allocation1 [shape = 'u32[144,128]{1,0:T(1,128)}', space=vmem, size = 0x12000, scoped, tag = 'internal scratch']
  %s0 = inlined_call_operand.vmem [shape: f32[8,32], index: 0, kind: input, shape index: {}]
  %s1 = inlined_call_operand.vmem [shape: f32[32,128], index: 1, kind: input, shape index: {}]
  %s2 = inlined_call_operand.vmem [shape: f32[1,128], index: 2, kind: input, shape index: {}]
  %s3 = inlined_call_operand.vmem [shape: f32[128,64], index: 3, kind: input, shape index: {}]
  %s4 = inlined_call_operand.vmem [shape: f32[1,64], index: 4, kind: input, shape index: {}]
  %s5 = inlined_call_operand.vmem [shape: f32[64,32], index: 5, kind: input, shape index: {}]
  %s6 = inlined_call_operand.vmem [shape: f32[1,32], index: 6, kind: input, shape index: {}]
  %s7 = inlined_call_operand.vmem [shape: f32[32,64], index: 7, kind: input, shape index: {}]
  %s8 = inlined_call_operand.vmem [shape: f32[1,64], index: 8, kind: input, shape index: {}]
  %s9 = inlined_call_operand.vmem [shape: f32[64,128], index: 9, kind: input, shape index: {}]
  %s10 = inlined_call_operand.vmem [shape: f32[1,128], index: 10, kind: input, shape index: {}]
  %s11 = inlined_call_operand.vmem [shape: f32[128,32], index: 11, kind: input, shape index: {}]
  %s12 = inlined_call_operand.vmem [shape: f32[1,32], index: 12, kind: input, shape index: {}]
  %s13 = inlined_call_operand.hbm [shape: f32[8,32], index: 13, kind: output, shape index: {}]
  %s14 = sld [smem:[#allocation0]]
  $region62: #{tpu_custom_call.1} parent=0
    _
  %s16 = ssub.s32 1, %s14
  %s17 = scalar_select 0, %s16, %s14
  $region1: #{tpu_custom_call.1} parent=0
    #allocation2 [shape = 'u8[4096]{0}', space=vmem, size = 0x1000, scoped, tag = 'output window, operand 0, single buffered']
    #allocation3 [shape = 's32[1]{0}', space=sflag, size = 0x4, scoped, tag = 'scoped memory for tpu_custom_call.1']
    %18 = vsyncpa [#allocation3], 0
    // Predicated region
    $region2: #{tpu_custom_call.1} parent=1 // pred_check
      _
    $region3: #{tpu_custom_call.1} parent=1 // pred_check_branch
      %20 = sbr.rel (0) target = $region5
    $region4: #{tpu_custom_call.1} parent=1 // pred_region
      _
    $region5: #{tpu_custom_call.1} parent=1 // pred_fallthru
      _
    // Predicated region
    $region6: #{tpu_custom_call.1} parent=1 // pred_check
      _
    $region7: #{tpu_custom_call.1} parent=1 // pred_check_branch
      %22 = sbr.rel (0) target = $region9
    $region8: #{tpu_custom_call.1} parent=1 // pred_region
      _
    $region9: #{tpu_custom_call.1} parent=1 // pred_fallthru
      _
    // Predicated region
    $region10: #{tpu_custom_call.1} parent=1 // pred_check
      _
    $region11: #{tpu_custom_call.1} parent=1 // pred_check_branch
      %24 = sbr.rel (0) target = $region13
    $region12: #{tpu_custom_call.1} parent=1 // pred_region
      _
    $region13: #{tpu_custom_call.1} parent=1 // pred_fallthru
      _
    // Predicated region
    $region14: #{tpu_custom_call.1} parent=1 // pred_check
      _
    $region15: #{tpu_custom_call.1} parent=1 // pred_check_branch
      %26 = sbr.rel (0) target = $region17
    $region16: #{tpu_custom_call.1} parent=1 // pred_region
      _
    $region17: #{tpu_custom_call.1} parent=1 // pred_fallthru
      _
    // Predicated region
    $region18: #{tpu_custom_call.1} parent=1 // pred_check
      _
    $region19: #{tpu_custom_call.1} parent=1 // pred_check_branch
      %28 = sbr.rel (0) target = $region21
    $region20: #{tpu_custom_call.1} parent=1 // pred_region
      _
    $region21: #{tpu_custom_call.1} parent=1 // pred_fallthru
      _
    // Predicated region
    $region22: #{tpu_custom_call.1} parent=1 // pred_check
      _
    $region23: #{tpu_custom_call.1} parent=1 // pred_check_branch
      %30 = sbr.rel (0) target = $region25
    $region24: #{tpu_custom_call.1} parent=1 // pred_region
      _
    $region25: #{tpu_custom_call.1} parent=1 // pred_fallthru
      _
    // Predicated region
    $region26: #{tpu_custom_call.1} parent=1 // pred_check
      _
    $region27: #{tpu_custom_call.1} parent=1 // pred_check_branch
      %32 = sbr.rel (0) target = $region29
    $region28: #{tpu_custom_call.1} parent=1 // pred_region
      _
    $region29: #{tpu_custom_call.1} parent=1 // pred_fallthru
      _
    // Predicated region
    $region30: #{tpu_custom_call.1} parent=1 // pred_check
      _
    $region31: #{tpu_custom_call.1} parent=1 // pred_check_branch
      %34 = sbr.rel (0) target = $region33
    $region32: #{tpu_custom_call.1} parent=1 // pred_region
      _
    $region33: #{tpu_custom_call.1} parent=1 // pred_fallthru
      _
    // Predicated region
    $region34: #{tpu_custom_call.1} parent=1 // pred_check
      _
    $region35: #{tpu_custom_call.1} parent=1 // pred_check_branch
      %36 = sbr.rel (0) target = $region37
    $region36: #{tpu_custom_call.1} parent=1 // pred_region
      _
    $region37: #{tpu_custom_call.1} parent=1 // pred_fallthru
      _
    // Predicated region
    $region38: #{tpu_custom_call.1} parent=1 // pred_check
      _
    $region39: #{tpu_custom_call.1} parent=1 // pred_check_branch
      %38 = sbr.rel (0) target = $region41
    $region40: #{tpu_custom_call.1} parent=1 // pred_region
      _
    $region41: #{tpu_custom_call.1} parent=1 // pred_fallthru
      _
    // Predicated region
    $region42: #{tpu_custom_call.1} parent=1 // pred_check
      _
    $region43: #{tpu_custom_call.1} parent=1 // pred_check_branch
      %40 = sbr.rel (0) target = $region45
    $region44: #{tpu_custom_call.1} parent=1 // pred_region
      _
    $region45: #{tpu_custom_call.1} parent=1 // pred_fallthru
      _
    // Predicated region
    $region46: #{tpu_custom_call.1} parent=1 // pred_check
      _
    $region47: #{tpu_custom_call.1} parent=1 // pred_check_branch
      %42 = sbr.rel (0) target = $region49
    $region48: #{tpu_custom_call.1} parent=1 // pred_region
      _
    $region49: #{tpu_custom_call.1} parent=1 // pred_fallthru
      _
    // Predicated region
    $region50: #{tpu_custom_call.1} parent=1 // pred_check
      _
    $region51: #{tpu_custom_call.1} parent=1 // pred_check_branch
      %44 = sbr.rel (0) target = $region53
    $region52: #{tpu_custom_call.1} parent=1 // pred_region
      _
    $region53: #{tpu_custom_call.1} parent=1 // pred_fallthru
      _
    %v45 = vld [vmem:[%s0] sm:$0xff]
    %v46 = vld [vmem:[%s1] sm:$0xff]
    %v47 = vld [vmem:[%s1 + $0x8] sm:$0xff]
    %v48 = vld [vmem:[%s1 + $0x10] sm:$0xff]
    %v49 = vld [vmem:[%s1 + $0x18] sm:$0xff]
    %v50 = vld [vmem:[%s2] sm:$0x1]
    %v52 = vlaneseq
    %v53 = vshrl.u32 %v52, 7
    %v54 = vsub.s32 0, %v53
    %v55 = vrot.slane %v50, %v54
    %vm57 = vcmask 261120
    %v59 = vsel %vm57, %v45, 0
    %61 = vmatprep.subr.mxu0 0.0
    %62 = vmatpush1.msra.mxu0 %v46
    %63 = vmatprep.subr.mxu0 0.0
    %64 = vmatpush1.msra.mxu0 %v47
    %65 = vmatprep.subr.mxu0 0.0
    %66 = vmatpush1.msra.mxu0 %v48
    %67 = vmatprep.subr.mxu0 0.0
    %68 = vmatpush1.msra.mxu0 %v49
    %69 = vmatprep.subr.mxu0 0.0
    %70 = vmatpush1.msra.mxu0 0.0
    %71 = vmatprep.subr.mxu0 0.0
    %72 = vmatpush1.msra.mxu0 0.0
    %73 = vmatprep.subr.mxu0 0.0
    %74 = vmatpush1.msra.mxu0 0.0
    %75 = vmatprep.subr.mxu0 0.0
    %76 = vmatpush1.msra.mxu0 0.0
    %77 = vmatprep.subr.mxu0 0.0
    %78 = vmatpush1.msra.mxu0 0.0
    %79 = vmatprep.subr.mxu0 0.0
    %80 = vmatpush1.msra.mxu0 0.0
    %81 = vmatprep.subr.mxu0 0.0
    %82 = vmatpush1.msra.mxu0 0.0
    %83 = vmatprep.subr.mxu0 0.0
    %84 = vmatpush1.msra.mxu0 0.0
    %85 = vmatprep.subr.mxu0 0.0
    %86 = vmatpush1.msra.mxu0 0.0
    %87 = vmatprep.subr.mxu0 0.0
    %88 = vmatpush1.msra.mxu0 0.0
    %89 = vmatprep.subr.mxu0 0.0
    %90 = vmatpush1.msra.mxu0 0.0
    %91 = vmatprep.subr.mxu0 0.0
    %92 = vmatpush1.msra.mxu0 0.0
    %93 = vmatprep.subr.mxu0 0.0
    %94 = vmatpush1.msra.mxu0 0.0
    %95 = vmatprep.subr.mxu0 0.0
    %96 = vmatpush1.msra.mxu0 0.0
    %97 = vmatprep.subr.mxu0 0.0
    %98 = vmatpush1.msra.mxu0 0.0
    %99 = vmatprep.subr.mxu0 0.0
    %100 = vmatpush1.msra.mxu0 0.0
    %101 = vmatprep.subr.mxu0 0.0
    %102 = vmatpush1.msra.mxu0 0.0
    %103 = vmatprep.subr.mxu0 0.0
    %104 = vmatpush1.msra.mxu0 0.0
    %105 = vmatprep.subr.mxu0 0.0
    %106 = vmatpush1.msra.mxu0 0.0
    %107 = vmatprep.subr.mxu0 0.0
    %108 = vmatpush1.msra.mxu0 0.0
    %109 = vmatprep.subr.mxu0 0.0
    %110 = vmatpush1.msra.mxu0 0.0
    %111 = vmatprep.subr.mxu0 0.0
    %112 = vmatpush1.msra.mxu0 0.0
    %113 = vmatprep.subr.mxu0 0.0
    %114 = vmatpush1.msra.mxu0 0.0
    %115 = vmatprep.subr.mxu0 0.0
    %116 = vmatpush1.msra.mxu0 0.0
    %117 = vmatprep.subr.mxu0 0.0
    %118 = vmatpush1.msra.mxu0 0.0
    %119 = vmatprep.subr.mxu0 0.0
    %120 = vmatpush1.msra.mxu0 0.0
    %121 = vmatprep.subr.mxu0 0.0
    %122 = vmatpush1.msra.mxu0 0.0
    %123 = vmatprep.subr.mxu0 0.0
    %124 = vmatpush1.msra.mxu0 0.0
    %125 = vmatprep.mubr.f32.mxu0 0.0
    %126 = vmatmul.mubr.f32.gmra.mrb[0].mxu0 %v59
    %v127 = vpop.f32.mrb[0].mxu0
    %v128 = vadd.f32 %v55, %v127
    %v129 = vpop.f32.mrb[0].mxu0
    %130 = vdwg.mxu0
    %v131 = vmax.f32 %v128, 0.0
    %v132 = vld [vmem:[%s3] sm:$0xff]
    %v133 = vld [vmem:[%s3 + $0x8] sm:$0xff]
    %v134 = vld [vmem:[%s3 + $0x10] sm:$0xff]
    %v135 = vld [vmem:[%s3 + $0x18] sm:$0xff]
    %v136 = vld [vmem:[%s3 + $0x20] sm:$0xff]
    %v137 = vld [vmem:[%s3 + $0x28] sm:$0xff]
    %v138 = vld [vmem:[%s3 + $0x30] sm:$0xff]
    %v139 = vld [vmem:[%s3 + $0x38] sm:$0xff]
    %v140 = vld [vmem:[%s3 + $0x40] sm:$0xff]
    %v141 = vld [vmem:[%s3 + $0x48] sm:$0xff]
    %v142 = vld [vmem:[%s3 + $0x50] sm:$0xff]
    %v143 = vld [vmem:[%s3 + $0x58] sm:$0xff]
    %v144 = vld [vmem:[%s3 + $0x60] sm:$0xff]
    %v145 = vld [vmem:[%s3 + $0x68] sm:$0xff]
    %v146 = vld [vmem:[%s3 + $0x70] sm:$0xff]
    %v147 = vld [vmem:[%s3 + $0x78] sm:$0xff]
    %v148 = vld [vmem:[%s4] sm:$0x1]
    %v150 = vlaneseq
    %v151 = vshrl.u32 %v150, 7
    %v152 = vsub.s32 0, %v151
    %v153 = vrot.slane %v148, %v152
    %155 = vmatprep.subr.mxu0 0.0
    %156 = vmatpush1.msra.mxu0 %v132
    %157 = vmatprep.subr.mxu0 0.0
    %158 = vmatpush1.msra.mxu0 %v133
    %159 = vmatprep.subr.mxu0 0.0
    %160 = vmatpush1.msra.mxu0 %v134
    %161 = vmatprep.subr.mxu0 0.0
    %162 = vmatpush1.msra.mxu0 %v135
    %163 = vmatprep.subr.mxu0 0.0
    %164 = vmatpush1.msra.mxu0 %v136
    %165 = vmatprep.subr.mxu0 0.0
    %166 = vmatpush1.msra.mxu0 %v137
    %167 = vmatprep.subr.mxu0 0.0
    %168 = vmatpush1.msra.mxu0 %v138
    %169 = vmatprep.subr.mxu0 0.0
    %170 = vmatpush1.msra.mxu0 %v139
    %171 = vmatprep.subr.mxu0 0.0
    %172 = vmatpush1.msra.mxu0 %v140
    %173 = vmatprep.subr.mxu0 0.0
    %174 = vmatpush1.msra.mxu0 %v141
    %175 = vmatprep.subr.mxu0 0.0
    %176 = vmatpush1.msra.mxu0 %v142
    %177 = vmatprep.subr.mxu0 0.0
    %178 = vmatpush1.msra.mxu0 %v143
    %179 = vmatprep.subr.mxu0 0.0
    %180 = vmatpush1.msra.mxu0 %v144
    %181 = vmatprep.subr.mxu0 0.0
    %182 = vmatpush1.msra.mxu0 %v145
    %183 = vmatprep.subr.mxu0 0.0
    %184 = vmatpush1.msra.mxu0 %v146
    %185 = vmatprep.subr.mxu0 0.0
    %186 = vmatpush1.msra.mxu0 %v147
    %187 = vmatprep.subr.mxu0 0.0
    %188 = vmatpush1.msra.mxu0 0.0
    %189 = vmatprep.subr.mxu0 0.0
    %190 = vmatpush1.msra.mxu0 0.0
    %191 = vmatprep.subr.mxu0 0.0
    %192 = vmatpush1.msra.mxu0 0.0
    %193 = vmatprep.subr.mxu0 0.0
    %194 = vmatpush1.msra.mxu0 0.0
    %195 = vmatprep.subr.mxu0 0.0
    %196 = vmatpush1.msra.mxu0 0.0
    %197 = vmatprep.subr.mxu0 0.0
    %198 = vmatpush1.msra.mxu0 0.0
    %199 = vmatprep.subr.mxu0 0.0
    %200 = vmatpush1.msra.mxu0 0.0
    %201 = vmatprep.subr.mxu0 0.0
    %202 = vmatpush1.msra.mxu0 0.0
    %203 = vmatprep.subr.mxu0 0.0
    %204 = vmatpush1.msra.mxu0 0.0
    %205 = vmatprep.subr.mxu0 0.0
    %206 = vmatpush1.msra.mxu0 0.0
    %207 = vmatprep.subr.mxu0 0.0
    %208 = vmatpush1.msra.mxu0 0.0
    %209 = vmatprep.subr.mxu0 0.0
    %210 = vmatpush1.msra.mxu0 0.0
    %211 = vmatprep.subr.mxu0 0.0
    %212 = vmatpush1.msra.mxu0 0.0
    %213 = vmatprep.subr.mxu0 0.0
    %214 = vmatpush1.msra.mxu0 0.0
    %215 = vmatprep.subr.mxu0 0.0
    %216 = vmatpush1.msra.mxu0 0.0
    %217 = vmatprep.subr.mxu0 0.0
    %218 = vmatpush1.msra.mxu0 0.0
    %219 = vmatprep.mubr.f32.mxu0 0.0
    %220 = vmatmul.mubr.f32.gmra.mrb[0].mxu0 %v131
    %v221 = vpop.f32.mrb[0].mxu0
    %v222 = vadd.f32 %v153, %v221
    %v223 = vpop.f32.mrb[0].mxu0
    %224 = vdwg.mxu0
    %v225 = vmax.f32 %v222, 0.0
    %v226 = vld [vmem:[%s5] sm:$0xff]
    %v227 = vld [vmem:[%s5 + $0x8] sm:$0xff]
    %v228 = vld [vmem:[%s5 + $0x10] sm:$0xff]
    %v229 = vld [vmem:[%s5 + $0x18] sm:$0xff]
    %v230 = vld [vmem:[%s5 + $0x20] sm:$0xff]
    %v231 = vld [vmem:[%s5 + $0x28] sm:$0xff]
    %v232 = vld [vmem:[%s5 + $0x30] sm:$0xff]
    %v233 = vld [vmem:[%s5 + $0x38] sm:$0xff]
    %v234 = vld [vmem:[%s6] sm:$0x1]
    %v236 = vlaneseq
    %v237 = vshrl.u32 %v236, 7
    %v238 = vsub.s32 0, %v237
    %v239 = vrot.slane %v234, %v238
    %vm241 = vcmask 523264
    %v243 = vsel %vm241, %v225, 0
    %245 = vmatprep.subr.mxu0 0.0
    %246 = vmatpush1.msra.mxu0 %v226
    %247 = vmatprep.subr.mxu0 0.0
    %248 = vmatpush1.msra.mxu0 %v227
    %249 = vmatprep.subr.mxu0 0.0
    %250 = vmatpush1.msra.mxu0 %v228
    %251 = vmatprep.subr.mxu0 0.0
    %252 = vmatpush1.msra.mxu0 %v229
    %253 = vmatprep.subr.mxu0 0.0
    %254 = vmatpush1.msra.mxu0 %v230
    %255 = vmatprep.subr.mxu0 0.0
    %256 = vmatpush1.msra.mxu0 %v231
    %257 = vmatprep.subr.mxu0 0.0
    %258 = vmatpush1.msra.mxu0 %v232
    %259 = vmatprep.subr.mxu0 0.0
    %260 = vmatpush1.msra.mxu0 %v233
    %261 = vmatprep.subr.mxu0 0.0
    %262 = vmatpush1.msra.mxu0 0.0
    %263 = vmatprep.subr.mxu0 0.0
    %264 = vmatpush1.msra.mxu0 0.0
    %265 = vmatprep.subr.mxu0 0.0
    %266 = vmatpush1.msra.mxu0 0.0
    %267 = vmatprep.subr.mxu0 0.0
    %268 = vmatpush1.msra.mxu0 0.0
    %269 = vmatprep.subr.mxu0 0.0
    %270 = vmatpush1.msra.mxu0 0.0
    %271 = vmatprep.subr.mxu0 0.0
    %272 = vmatpush1.msra.mxu0 0.0
    %273 = vmatprep.subr.mxu0 0.0
    %274 = vmatpush1.msra.mxu0 0.0
    %275 = vmatprep.subr.mxu0 0.0
    %276 = vmatpush1.msra.mxu0 0.0
    %277 = vmatprep.subr.mxu0 0.0
    %278 = vmatpush1.msra.mxu0 0.0
    %279 = vmatprep.subr.mxu0 0.0
    %280 = vmatpush1.msra.mxu0 0.0
    %281 = vmatprep.subr.mxu0 0.0
    %282 = vmatpush1.msra.mxu0 0.0
    %283 = vmatprep.subr.mxu0 0.0
    %284 = vmatpush1.msra.mxu0 0.0
    %285 = vmatprep.subr.mxu0 0.0
    %286 = vmatpush1.msra.mxu0 0.0
    %287 = vmatprep.subr.mxu0 0.0
    %288 = vmatpush1.msra.mxu0 0.0
    %289 = vmatprep.subr.mxu0 0.0
    %290 = vmatpush1.msra.mxu0 0.0
    %291 = vmatprep.subr.mxu0 0.0
    %292 = vmatpush1.msra.mxu0 0.0
    %293 = vmatprep.subr.mxu0 0.0
    %294 = vmatpush1.msra.mxu0 0.0
    %295 = vmatprep.subr.mxu0 0.0
    %296 = vmatpush1.msra.mxu0 0.0
    %297 = vmatprep.subr.mxu0 0.0
    %298 = vmatpush1.msra.mxu0 0.0
    %299 = vmatprep.subr.mxu0 0.0
    %300 = vmatpush1.msra.mxu0 0.0
    %301 = vmatprep.subr.mxu0 0.0
    %302 = vmatpush1.msra.mxu0 0.0
    %303 = vmatprep.subr.mxu0 0.0
    %304 = vmatpush1.msra.mxu0 0.0
    %305 = vmatprep.subr.mxu0 0.0
    %306 = vmatpush1.msra.mxu0 0.0
    %307 = vmatprep.subr.mxu0 0.0
    %308 = vmatpush1.msra.mxu0 0.0
    %309 = vmatprep.mubr.f32.mxu0 0.0
    %310 = vmatmul.mubr.f32.gmra.mrb[0].mxu0 %v243
    %v311 = vpop.f32.mrb[0].mxu0
    %v312 = vadd.f32 %v239, %v311
    %v313 = vpop.f32.mrb[0].mxu0
    %314 = vdwg.mxu0
    %v315 = vmax.f32 %v312, 0.0
    %v316 = vld [vmem:[%s7] sm:$0xff]
    %v317 = vld [vmem:[%s7 + $0x8] sm:$0xff]
    %v318 = vld [vmem:[%s7 + $0x10] sm:$0xff]
    %v319 = vld [vmem:[%s7 + $0x18] sm:$0xff]
    %v320 = vld [vmem:[%s8] sm:$0x1]
    %v322 = vlaneseq
    %v323 = vshrl.u32 %v322, 7
    %v324 = vsub.s32 0, %v323
    %v325 = vrot.slane %v320, %v324
    %v328 = vsel %vm57, %v315, 0
    %330 = vmatprep.subr.mxu0 0.0
    %331 = vmatpush1.msra.mxu0 %v316
    %332 = vmatprep.subr.mxu0 0.0
    %333 = vmatpush1.msra.mxu0 %v317
    %334 = vmatprep.subr.mxu0 0.0
    %335 = vmatpush1.msra.mxu0 %v318
    %336 = vmatprep.subr.mxu0 0.0
    %337 = vmatpush1.msra.mxu0 %v319
    %338 = vmatprep.subr.mxu0 0.0
    %339 = vmatpush1.msra.mxu0 0.0
    %340 = vmatprep.subr.mxu0 0.0
    %341 = vmatpush1.msra.mxu0 0.0
    %342 = vmatprep.subr.mxu0 0.0
    %343 = vmatpush1.msra.mxu0 0.0
    %344 = vmatprep.subr.mxu0 0.0
    %345 = vmatpush1.msra.mxu0 0.0
    %346 = vmatprep.subr.mxu0 0.0
    %347 = vmatpush1.msra.mxu0 0.0
    %348 = vmatprep.subr.mxu0 0.0
    %349 = vmatpush1.msra.mxu0 0.0
    %350 = vmatprep.subr.mxu0 0.0
    %351 = vmatpush1.msra.mxu0 0.0
    %352 = vmatprep.subr.mxu0 0.0
    %353 = vmatpush1.msra.mxu0 0.0
    %354 = vmatprep.subr.mxu0 0.0
    %355 = vmatpush1.msra.mxu0 0.0
    %356 = vmatprep.subr.mxu0 0.0
    %357 = vmatpush1.msra.mxu0 0.0
    %358 = vmatprep.subr.mxu0 0.0
    %359 = vmatpush1.msra.mxu0 0.0
    %360 = vmatprep.subr.mxu0 0.0
    %361 = vmatpush1.msra.mxu0 0.0
    %362 = vmatprep.subr.mxu0 0.0
    %363 = vmatpush1.msra.mxu0 0.0
    %364 = vmatprep.subr.mxu0 0.0
    %365 = vmatpush1.msra.mxu0 0.0
    %366 = vmatprep.subr.mxu0 0.0
    %367 = vmatpush1.msra.mxu0 0.0
    %368 = vmatprep.subr.mxu0 0.0
    %369 = vmatpush1.msra.mxu0 0.0
    %370 = vmatprep.subr.mxu0 0.0
    %371 = vmatpush1.msra.mxu0 0.0
    %372 = vmatprep.subr.mxu0 0.0
    %373 = vmatpush1.msra.mxu0 0.0
    %374 = vmatprep.subr.mxu0 0.0
    %375 = vmatpush1.msra.mxu0 0.0
    %376 = vmatprep.subr.mxu0 0.0
    %377 = vmatpush1.msra.mxu0 0.0
    %378 = vmatprep.subr.mxu0 0.0
    %379 = vmatpush1.msra.mxu0 0.0
    %380 = vmatprep.subr.mxu0 0.0
    %381 = vmatpush1.msra.mxu0 0.0
    %382 = vmatprep.subr.mxu0 0.0
    %383 = vmatpush1.msra.mxu0 0.0
    %384 = vmatprep.subr.mxu0 0.0
    %385 = vmatpush1.msra.mxu0 0.0
    %386 = vmatprep.subr.mxu0 0.0
    %387 = vmatpush1.msra.mxu0 0.0
    %388 = vmatprep.subr.mxu0 0.0
    %389 = vmatpush1.msra.mxu0 0.0
    %390 = vmatprep.subr.mxu0 0.0
    %391 = vmatpush1.msra.mxu0 0.0
    %392 = vmatprep.subr.mxu0 0.0
    %393 = vmatpush1.msra.mxu0 0.0
    %394 = vmatprep.mubr.f32.mxu0 0.0
    %395 = vmatmul.mubr.f32.gmra.mrb[0].mxu0 %v328
    %v396 = vpop.f32.mrb[0].mxu0
    %v397 = vadd.f32 %v325, %v396
    %v398 = vpop.f32.mrb[0].mxu0
    %399 = vdwg.mxu0
    %v400 = vmax.f32 %v397, 0.0
    %v401 = vld [vmem:[%s9] sm:$0xff]
    %v402 = vld [vmem:[%s9 + $0x8] sm:$0xff]
    %v403 = vld [vmem:[%s9 + $0x10] sm:$0xff]
    %v404 = vld [vmem:[%s9 + $0x18] sm:$0xff]
    %v405 = vld [vmem:[%s9 + $0x20] sm:$0xff]
    %v406 = vld [vmem:[%s9 + $0x28] sm:$0xff]
    %v407 = vld [vmem:[%s9 + $0x30] sm:$0xff]
    %v408 = vld [vmem:[%s9 + $0x38] sm:$0xff]
    %v409 = vld [vmem:[%s10] sm:$0x1]
    %v411 = vlaneseq
    %v412 = vshrl.u32 %v411, 7
    %v413 = vsub.s32 0, %v412
    %v414 = vrot.slane %v409, %v413
    %v417 = vsel %vm241, %v400, 0
    %419 = vmatprep.subr.mxu0 0.0
    %420 = vmatpush1.msra.mxu0 %v401
    %421 = vmatprep.subr.mxu0 0.0
    %422 = vmatpush1.msra.mxu0 %v402
    %423 = vmatprep.subr.mxu0 0.0
    %424 = vmatpush1.msra.mxu0 %v403
    %425 = vmatprep.subr.mxu0 0.0
    %426 = vmatpush1.msra.mxu0 %v404
    %427 = vmatprep.subr.mxu0 0.0
    %428 = vmatpush1.msra.mxu0 %v405
    %429 = vmatprep.subr.mxu0 0.0
    %430 = vmatpush1.msra.mxu0 %v406
    %431 = vmatprep.subr.mxu0 0.0
    %432 = vmatpush1.msra.mxu0 %v407
    %433 = vmatprep.subr.mxu0 0.0
    %434 = vmatpush1.msra.mxu0 %v408
    %435 = vmatprep.subr.mxu0 0.0
    %436 = vmatpush1.msra.mxu0 0.0
    %437 = vmatprep.subr.mxu0 0.0
    %438 = vmatpush1.msra.mxu0 0.0
    %439 = vmatprep.subr.mxu0 0.0
    %440 = vmatpush1.msra.mxu0 0.0
    %441 = vmatprep.subr.mxu0 0.0
    %442 = vmatpush1.msra.mxu0 0.0
    %443 = vmatprep.subr.mxu0 0.0
    %444 = vmatpush1.msra.mxu0 0.0
    %445 = vmatprep.subr.mxu0 0.0
    %446 = vmatpush1.msra.mxu0 0.0
    %447 = vmatprep.subr.mxu0 0.0
    %448 = vmatpush1.msra.mxu0 0.0
    %449 = vmatprep.subr.mxu0 0.0
    %450 = vmatpush1.msra.mxu0 0.0
    %451 = vmatprep.subr.mxu0 0.0
    %452 = vmatpush1.msra.mxu0 0.0
    %453 = vmatprep.subr.mxu0 0.0
    %454 = vmatpush1.msra.mxu0 0.0
    %455 = vmatprep.subr.mxu0 0.0
    %456 = vmatpush1.msra.mxu0 0.0
    %457 = vmatprep.subr.mxu0 0.0
    %458 = vmatpush1.msra.mxu0 0.0
    %459 = vmatprep.subr.mxu0 0.0
    %460 = vmatpush1.msra.mxu0 0.0
    %461 = vmatprep.subr.mxu0 0.0
    %462 = vmatpush1.msra.mxu0 0.0
    %463 = vmatprep.subr.mxu0 0.0
    %464 = vmatpush1.msra.mxu0 0.0
    %465 = vmatprep.subr.mxu0 0.0
    %466 = vmatpush1.msra.mxu0 0.0
    %467 = vmatprep.subr.mxu0 0.0
    %468 = vmatpush1.msra.mxu0 0.0
    %469 = vmatprep.subr.mxu0 0.0
    %470 = vmatpush1.msra.mxu0 0.0
    %471 = vmatprep.subr.mxu0 0.0
    %472 = vmatpush1.msra.mxu0 0.0
    %473 = vmatprep.subr.mxu0 0.0
    %474 = vmatpush1.msra.mxu0 0.0
    %475 = vmatprep.subr.mxu0 0.0
    %476 = vmatpush1.msra.mxu0 0.0
    %477 = vmatprep.subr.mxu0 0.0
    %478 = vmatpush1.msra.mxu0 0.0
    %479 = vmatprep.subr.mxu0 0.0
    %480 = vmatpush1.msra.mxu0 0.0
    %481 = vmatprep.subr.mxu0 0.0
    %482 = vmatpush1.msra.mxu0 0.0
    %483 = vmatprep.mubr.f32.mxu0 0.0
    %484 = vmatmul.mubr.f32.gmra.mrb[0].mxu0 %v417
    %v485 = vpop.f32.mrb[0].mxu0
    %v486 = vadd.f32 %v414, %v485
    %v487 = vpop.f32.mrb[0].mxu0
    %488 = vdwg.mxu0
    %v489 = vmax.f32 %v486, 0.0
    %v490 = vld [vmem:[%s11] sm:$0xff]
    %v491 = vld [vmem:[%s11 + $0x8] sm:$0xff]
    %v492 = vld [vmem:[%s11 + $0x10] sm:$0xff]
    %v493 = vld [vmem:[%s11 + $0x18] sm:$0xff]
    %v494 = vld [vmem:[%s11 + $0x20] sm:$0xff]
    %v495 = vld [vmem:[%s11 + $0x28] sm:$0xff]
    %v496 = vld [vmem:[%s11 + $0x30] sm:$0xff]
    %v497 = vld [vmem:[%s11 + $0x38] sm:$0xff]
    %v498 = vld [vmem:[%s11 + $0x40] sm:$0xff]
    %v499 = vld [vmem:[%s11 + $0x48] sm:$0xff]
    %v500 = vld [vmem:[%s11 + $0x50] sm:$0xff]
    %v501 = vld [vmem:[%s11 + $0x58] sm:$0xff]
    %v502 = vld [vmem:[%s11 + $0x60] sm:$0xff]
    %v503 = vld [vmem:[%s11 + $0x68] sm:$0xff]
    %v504 = vld [vmem:[%s11 + $0x70] sm:$0xff]
    %v505 = vld [vmem:[%s11 + $0x78] sm:$0xff]
    %v506 = vld [vmem:[%s12] sm:$0x1]
    %v508 = vlaneseq
    %v509 = vshrl.u32 %v508, 7
    %v510 = vsub.s32 0, %v509
    %v511 = vrot.slane %v506, %v510
    %513 = vmatprep.subr.mxu0 0.0
    %514 = vmatpush1.msra.mxu0 %v490
    %515 = vmatprep.subr.mxu0 0.0
    %516 = vmatpush1.msra.mxu0 %v491
    %517 = vmatprep.subr.mxu0 0.0
    %518 = vmatpush1.msra.mxu0 %v492
    %519 = vmatprep.subr.mxu0 0.0
    %520 = vmatpush1.msra.mxu0 %v493
    %521 = vmatprep.subr.mxu0 0.0
    %522 = vmatpush1.msra.mxu0 %v494
    %523 = vmatprep.subr.mxu0 0.0
    %524 = vmatpush1.msra.mxu0 %v495
    %525 = vmatprep.subr.mxu0 0.0
    %526 = vmatpush1.msra.mxu0 %v496
    %527 = vmatprep.subr.mxu0 0.0
    %528 = vmatpush1.msra.mxu0 %v497
    %529 = vmatprep.subr.mxu0 0.0
    %530 = vmatpush1.msra.mxu0 %v498
    %531 = vmatprep.subr.mxu0 0.0
    %532 = vmatpush1.msra.mxu0 %v499
    %533 = vmatprep.subr.mxu0 0.0
    %534 = vmatpush1.msra.mxu0 %v500
    %535 = vmatprep.subr.mxu0 0.0
    %536 = vmatpush1.msra.mxu0 %v501
    %537 = vmatprep.subr.mxu0 0.0
    %538 = vmatpush1.msra.mxu0 %v502
    %539 = vmatprep.subr.mxu0 0.0
    %540 = vmatpush1.msra.mxu0 %v503
    %541 = vmatprep.subr.mxu0 0.0
    %542 = vmatpush1.msra.mxu0 %v504
    %543 = vmatprep.subr.mxu0 0.0
    %544 = vmatpush1.msra.mxu0 %v505
    %545 = vmatprep.subr.mxu0 0.0
    %546 = vmatpush1.msra.mxu0 0.0
    %547 = vmatprep.subr.mxu0 0.0
    %548 = vmatpush1.msra.mxu0 0.0
    %549 = vmatprep.subr.mxu0 0.0
    %550 = vmatpush1.msra.mxu0 0.0
    %551 = vmatprep.subr.mxu0 0.0
    %552 = vmatpush1.msra.mxu0 0.0
    %553 = vmatprep.subr.mxu0 0.0
    %554 = vmatpush1.msra.mxu0 0.0
    %555 = vmatprep.subr.mxu0 0.0
    %556 = vmatpush1.msra.mxu0 0.0
    %557 = vmatprep.subr.mxu0 0.0
    %558 = vmatpush1.msra.mxu0 0.0
    %559 = vmatprep.subr.mxu0 0.0
    %560 = vmatpush1.msra.mxu0 0.0
    %561 = vmatprep.subr.mxu0 0.0
    %562 = vmatpush1.msra.mxu0 0.0
    %563 = vmatprep.subr.mxu0 0.0
    %564 = vmatpush1.msra.mxu0 0.0
    %565 = vmatprep.subr.mxu0 0.0
    %566 = vmatpush1.msra.mxu0 0.0
    %567 = vmatprep.subr.mxu0 0.0
    %568 = vmatpush1.msra.mxu0 0.0
    %569 = vmatprep.subr.mxu0 0.0
    %570 = vmatpush1.msra.mxu0 0.0
    %571 = vmatprep.subr.mxu0 0.0
    %572 = vmatpush1.msra.mxu0 0.0
    %573 = vmatprep.subr.mxu0 0.0
    %574 = vmatpush1.msra.mxu0 0.0
    %575 = vmatprep.subr.mxu0 0.0
    %576 = vmatpush1.msra.mxu0 0.0
    %577 = vmatprep.mubr.f32.mxu0 0.0
    %578 = vmatmul.mubr.f32.gmra.mrb[0].mxu0 %v489
    %v579 = vpop.f32.mrb[0].mxu0
    %v580 = vadd.f32 %v511, %v579
    %v581 = vpop.f32.mrb[0].mxu0
    %582 = vdwg.mxu0
    %583 = vst.msk [vmem:[#allocation2] sm:$0xff] %vm57, %v580
    // Predicated region
    $region54: #{tpu_custom_call.1} parent=1 // pred_check
      _
    $region55: #{tpu_custom_call.1} parent=1 // pred_check_branch
      %585 = sbr.rel (0) target = $region57
    $region56: #{tpu_custom_call.1} parent=1 // pred_region
      %s587 = ssub.s32 128, 128
      %588 = vsyncadd [#allocation3], %s587
      %s590 = sshll.u32 [#allocation2], 4
      %s591 = int_to_ptr.vmem [resolvable:$true] %s590
      %593 = dma.vmem_to_hbm [thread:$0]  %s591, 128, %s13, [#allocation3]
    $region57: #{tpu_custom_call.1} parent=1 // pred_fallthru
      _
    // Predicated region
    $region58: #{tpu_custom_call.1} parent=1 // pred_check
      _
    $region59: #{tpu_custom_call.1} parent=1 // pred_check_branch
      %595 = sbr.rel (0) target = $region61
    $region60: #{tpu_custom_call.1} parent=1 // pred_region
      %596 = dma.done [#allocation3], 128
    $region61: #{tpu_custom_call.1} parent=1 // pred_fallthru
      _
    %597 = vsyncpa [#allocation3], 1

</llo_original>
